<compile_context>
chip_gen: v5e
topology: v5e:2x2
jax: 0.10.0
libtpu: 0.0.40
codegen_flags: <defaults>
</compile_context>

<pallas_src>
import functools

import jax
import jax.numpy as jnp
import numpy as np
from jax.experimental import pallas as pl
from jax.experimental.pallas import tpu as pltpu

HIDDEN = 1024          # MLP([2, 1024, 1]) hidden width
SUB, LANE = 8, 128     # HIDDEN == SUB * LANE -> one full f32 vreg tile
NMAX = 10              # RModel default nmax


# ---------------------------------------------------------------------------
# Fused kernel (one grid point per independent (x, y0) sample)
# ---------------------------------------------------------------------------
def _make_kernel(nmax):
    nout = nmax + 1

    def kernel(x_ref, y0_ref, b2_ref, w_ref, out_ref):
        b = pl.program_id(0)

        # scalars (SMEM)
        x = x_ref[b]
        y0 = y0_ref[b]
        de_b2 = b2_ref[0]
        val_b2 = b2_ref[1]

        # packed weights (VMEM): each row is a stacked (16,128) tile whose
        # sublanes 0..7 hold the de MLP and sublanes 8..15 hold the val MLP.
        wx = w_ref[0]      # Linear(2,H).weight[:,0]  (16,128)
        wy = w_ref[1]      # Linear(2,H).weight[:,1]  (16,128)
        b1 = w_ref[2]      # Linear(2,H).bias         (16,128)
        w2 = w_ref[3]      # Linear(H,1).weight       (16,128)

        # Hoisted loop-invariant: x is constant across all MLP evaluations.
        hx = x * wx + b1                                          # (16,128)

        def stacked(y):
            """de(y) and val(y) in one (16,128) tile. y: (1,1) f32."""
            h = y * wy + hx                                       # (16,128)
            # ELU(alpha=1); clamp exp arg so the unselected branch stays finite
            h = jnp.where(h > 0.0, h, jnp.exp(jnp.minimum(h, 0.0)) - 1.0)
            s = h * w2                                            # (16,128)
            sd = s[0:8, :]                                        # de half
            sv = s[8:16, :]                                       # val half
            d = jnp.sum(jnp.sum(sd, axis=0, keepdims=True),
                        axis=1, keepdims=True) + de_b2            # (1,1)
            v = jnp.sum(jnp.sum(sv, axis=0, keepdims=True),
                        axis=1, keepdims=True) + val_b2           # (1,1)
            return d, v

        y = jnp.full((1, 1), y0, dtype=jnp.float32)
        ys = [y]
        d, v = stacked(y)              # de(y0), val(y0)   -> V0
        vs = [v]

        # fully unrolled fixed-trip loop (nmax small and static); the PyTorch
        # data-dependent break is applied on the host from the v row.
        for _ in range(nmax):
            y = y + d                  # y_{k+1} = y_k + de(y_k)
            ys.append(y)
            d, v = stacked(y)          # de(y_{k+1}) [used next iter], val(y_{k+1})
            vs.append(v)
        # (the final unused de reduction is dead code and gets eliminated)

        # Lane-dense output: pack the nout scalars into (1,128) vregs with
        # static one-hot selects, then two unmasked stores.
        lane = jax.lax.broadcasted_iota(jnp.int32, (1, LANE), 1)
        acc_y = jnp.zeros((1, LANE), jnp.float32)
        acc_v = jnp.zeros((1, LANE), jnp.float32)
        for i in range(nout):
            acc_y = jnp.where(lane == i, ys[i], acc_y)
            acc_v = jnp.where(lane == i, vs[i], acc_v)
        out_ref[0:1, :] = acc_y
        out_ref[1:2, :] = acc_v

    return kernel


@functools.lru_cache(maxsize=None)
def _build_forward(nmax, batch):
    """jitted callable: (X, Y0, w_slab, b2s) -> (batch, 2, 128) f32."""
    call = pl.pallas_call(
        _make_kernel(nmax),
        out_shape=jax.ShapeDtypeStruct((batch, 2, LANE), jnp.float32),
        grid=(batch,),
        in_specs=[
            pl.BlockSpec(memory_space=pltpu.MemorySpace.SMEM),   # x   (B,)
            pl.BlockSpec(memory_space=pltpu.MemorySpace.SMEM),   # y0  (B,)
            pl.BlockSpec(memory_space=pltpu.MemorySpace.SMEM),   # b2s (2,)
            pl.BlockSpec(memory_space=pltpu.MemorySpace.VMEM),   # w   (4,16,128)
        ],
        out_specs=pl.BlockSpec((None, 2, LANE), lambda b: (b, 0, 0)),
        compiler_params=pltpu.CompilerParams(
            dimension_semantics=("parallel",)),   # 2x on v7x (2 TCs) for batch>1
    )

    def fwd(X, Y0, w_slab, b2s):
        x = jnp.reshape(jnp.asarray(X, jnp.float32), (batch,))
        y0 = jnp.reshape(jnp.asarray(Y0, jnp.float32), (batch,))
        return call(x, y0, b2s, w_slab)

    return jax.jit(fwd)


# ---------------------------------------------------------------------------
# Parameters (PyTorch _init_layers: Linear weight ~ N(0, 0.5), bias = 0)
# ---------------------------------------------------------------------------
def make_mlp_params(key):
    k1, k2 = jax.random.split(key)
    w1 = 0.5 * jax.random.normal(k1, (2, HIDDEN), jnp.float32)   # Linear(2,H).weight.T
    b1 = jnp.zeros((HIDDEN,), jnp.float32)
    w2 = 0.5 * jax.random.normal(k2, (HIDDEN,), jnp.float32)     # Linear(H,1).weight[0]
    b2 = jnp.zeros((), jnp.float32)
    return w1, b1, w2, b2


def pack_params(de_params, val_params):
    """Pack both MLPs into one (4,16,128) f32 slab + (2,) output biases."""
    dw1, db1, dw2, db2 = de_params
    vw1, vb1, vw2, vb2 = val_params

    def stack16(d_row, v_row):           # each row (1024,) -> (16,128)
        return jnp.concatenate([jnp.reshape(d_row, (SUB, LANE)),
                                jnp.reshape(v_row, (SUB, LANE))], axis=0)

    w_slab = jnp.stack([stack16(dw1[0], vw1[0]),    # wx
                        stack16(dw1[1], vw1[1]),    # wy
                        stack16(db1, vb1),          # b1
                        stack16(dw2, vw2)],         # w2
                       axis=0).astype(jnp.float32)                 # (4,16,128)
    b2s = jnp.stack([jnp.asarray(db2, jnp.float32),
                     jnp.asarray(vb2, jnp.float32)])               # (2,)
    return w_slab, b2s


# ---------------------------------------------------------------------------
# Model wrapper (weights packed once; single readback, zero device puts)
# ---------------------------------------------------------------------------
class RModelPallas:
    def __init__(self, de_params, val_params, nmax=NMAX):
        self.nmax = nmax
        self.w_slab, self.b2s = pack_params(de_params, val_params)  # packed ONCE

    def __call__(self, X, Y0=None):
        """Mirrors RModel.forward for a single (1,1) sample."""
        X = jnp.asarray(X, jnp.float32)
        if X.size != 1:
            raise ValueError("RModelPallas forward expects a (1,1) X (batch=1); "
                             "use rollout_batch() for batched rollouts.")
        if Y0 is None:
            Y0 = jnp.zeros((1, 1), jnp.float32)   # matches torch.zeros(1,1)

        out = _build_forward(self.nmax, 1)(X, Y0, self.w_slab, self.b2s)
        host = np.asarray(jax.device_get(out))[0]          # (2, 128), one readback
        y_np = host[0, :self.nmax + 1]
        v_np = host[1, :self.nmax + 1]

        # Replicate the data-dependent early break on the host:
        # break after appending step i+1 if i > 0 and V_{i+1} >= V_i.
        n = 1
        for i in range(self.nmax):
            n += 1
            if i > 0 and v_np[i + 1] >= v_np[i]:
                break

        ylst = [np.asarray(y_np[k], np.float32).reshape(1, 1) for k in range(n)]
        vlst = [np.asarray(v_np[k], np.float32).reshape(1, 1) for k in range(n)]
        return ylst, vlst

    def rollout_batch(self, X, Y0=None):
        """B independent rollouts in one launch (amortizes launch cost; uses
        both TensorCores on v7x). Returns device arrays (y, v), each
        (B, nmax+1); per-sample break logic is left to the caller."""
        X = jnp.reshape(jnp.asarray(X, jnp.float32), (-1,))
        B = X.shape[0]
        if Y0 is None:
            Y0 = jnp.zeros((B,), jnp.float32)
        out = _build_forward(self.nmax, B)(X, Y0, self.w_slab, self.b2s)
        return out[:, 0, :self.nmax + 1], out[:, 1, :self.nmax + 1]


# ---------------------------------------------------------------------------
# Pure-JAX reference (light sanity check on the first steps)
# ---------------------------------------------------------------------------
def _mlp_ref(params, x, y):
    w1, b1, w2, b2 = params
    h = x * w1[0] + y * w1[1] + b1
    h = jnp.where(h > 0.0, h, jnp.exp(jnp.minimum(h, 0.0)) - 1.0)
    return jnp.sum(h * w2) + b2


if __name__ == "__main__":
    key = jax.random.PRNGKey(0)
    kx, kd, kv = jax.random.split(key, 3)
    kb = jax.random.fold_in(key, 123)

    # X must be (1,1): the module compares the scalar-valued V tensor with `>=`.
    X = jax.random.normal(kx, (1, 1), jnp.float32)
    Y0 = jnp.zeros((1, 1), jnp.float32)   # default Y = torch.zeros(1, 1)

    de_params = make_mlp_params(kd)
    val_params = make_mlp_params(kv)

    model = RModelPallas(de_params, val_params, nmax=NMAX)

    # --- single-sample forward (exact RModel semantics) ---
    ylst, vlst = model(X, Y0)

    # Light correctness check on the first iteration (avoids chaotic error
    # amplification of later iterates; reduction-order differences only).
    x0 = float(X[0, 0]); y0 = float(Y0[0, 0])
    v0_ref = float(_mlp_ref(val_params, x0, y0))
    y1_ref = y0 + float(_mlp_ref(de_params, x0, y0))
    v1_ref = float(_mlp_ref(val_params, x0, y1_ref))
    np.testing.assert_allclose(float(vlst[0][0, 0]), v0_ref, rtol=5e-3, atol=5e-2)
    np.testing.assert_allclose(float(ylst[1][0, 0]), y1_ref, rtol=5e-3, atol=5e-2)
    np.testing.assert_allclose(float(vlst[1][0, 0]), v1_ref, rtol=5e-3, atol=5e-2)

    # --- batched rollouts (one launch, parallel grid axis) ---
    Xb = jax.random.normal(kb, (4,), jnp.float32)
    yb, vb = model.rollout_batch(Xb)
    yb, vb = jax.block_until_ready(yb), jax.block_until_ready(vb)
    vb_np = np.asarray(vb)
    for b in range(4):
        v0b_ref = float(_mlp_ref(val_params, float(Xb[b]), 0.0))
        np.testing.assert_allclose(vb_np[b, 0], v0b_ref, rtol=5e-3, atol=5e-2)

    print("KERNEL_OK")
</pallas_src>

<mosaic_0001>
module attributes {stable_mosaic.version = 11 : i64} {
  func.func @kernel(%arg0: i32, %arg1: memref<1xf32, #tpu.memory_space<smem>>, %arg2: memref<1xf32, #tpu.memory_space<smem>>, %arg3: memref<2xf32, #tpu.memory_space<smem>>, %arg4: memref<4x16x128xf32, #tpu.memory_space<vmem>>, %arg5: memref<1x2x128xf32, #tpu.memory_space<vmem>>) attributes {dimension_semantics = [#tpu.dimension_semantics<parallel>], iteration_bounds = array<i64: 1>, scalar_prefetch = 0 : i64, scratch_operands = 0 : i64, tpu.core_type = #tpu.core_type<tc>, window_params = [{transform_indices = @transform_0, window_bounds = array<i64: 1>}, {transform_indices = @transform_1, window_bounds = array<i64: 1>}, {transform_indices = @transform_2, window_bounds = array<i64: 2>}, {pipeline_mode = #tpu.pipeline_mode<synchronous>, transform_indices = @transform_3, window_bounds = array<i64: 4, 16, 128>}, {transform_indices = @transform_4, window_bounds = array<i64: 1, 2, 128>}]} {
    %0 = arith.index_cast %arg0 : i32 to index
    %1 = memref.load %arg1[%0] : memref<1xf32, #tpu.memory_space<smem>>
    %2 = arith.index_cast %arg0 : i32 to index
    %3 = memref.load %arg2[%2] : memref<1xf32, #tpu.memory_space<smem>>
    %c0 = arith.constant 0 : index
    %4 = memref.load %arg3[%c0] : memref<2xf32, #tpu.memory_space<smem>>
    %c1 = arith.constant 1 : index
    %5 = memref.load %arg3[%c1] : memref<2xf32, #tpu.memory_space<smem>>
    %c0_0 = arith.constant 0 : index
    %c0_1 = arith.constant 0 : index
    %c0_2 = arith.constant 0 : index
    %6 = vector.load %arg4[%c0_0, %c0_1, %c0_2] : memref<4x16x128xf32, #tpu.memory_space<vmem>>, vector<1x16x128xf32>
    %7 = vector.shape_cast %6 : vector<1x16x128xf32> to vector<16x128xf32>
    %c1_3 = arith.constant 1 : index
    %c0_4 = arith.constant 0 : index
    %c0_5 = arith.constant 0 : index
    %8 = vector.load %arg4[%c1_3, %c0_4, %c0_5] : memref<4x16x128xf32, #tpu.memory_space<vmem>>, vector<1x16x128xf32>
    %9 = vector.shape_cast %8 : vector<1x16x128xf32> to vector<16x128xf32>
    %c2 = arith.constant 2 : index
    %c0_6 = arith.constant 0 : index
    %c0_7 = arith.constant 0 : index
    %10 = vector.load %arg4[%c2, %c0_6, %c0_7] : memref<4x16x128xf32, #tpu.memory_space<vmem>>, vector<1x16x128xf32>
    %11 = vector.shape_cast %10 : vector<1x16x128xf32> to vector<16x128xf32>
    %c3 = arith.constant 3 : index
    %c0_8 = arith.constant 0 : index
    %c0_9 = arith.constant 0 : index
    %12 = vector.load %arg4[%c3, %c0_8, %c0_9] : memref<4x16x128xf32, #tpu.memory_space<vmem>>, vector<1x16x128xf32>
    %13 = vector.shape_cast %12 : vector<1x16x128xf32> to vector<16x128xf32>
    %14 = vector.broadcast %1 : f32 to vector<16x128xf32>
    %15 = arith.mulf %14, %7 : vector<16x128xf32>
    %16 = arith.addf %15, %11 : vector<16x128xf32>
    %17 = vector.broadcast %3 : f32 to vector<1x1xf32>
    %18 = vector.broadcast %17 : vector<1x1xf32> to vector<16x128xf32>
    %19 = arith.mulf %18, %9 : vector<16x128xf32>
    %20 = arith.addf %19, %16 : vector<16x128xf32>
    %cst = arith.constant 0.000000e+00 : f32
    %21 = vector.broadcast %cst : f32 to vector<16x128xf32>
    %22 = arith.cmpf ogt, %20, %21 : vector<16x128xf32>
    %cst_10 = arith.constant 0.000000e+00 : f32
    %23 = vector.broadcast %cst_10 : f32 to vector<16x128xf32>
    %24 = arith.minimumf %20, %23 : vector<16x128xf32>
    %25 = math.exp %24 : vector<16x128xf32>
    %cst_11 = arith.constant 1.000000e+00 : f32
    %26 = vector.broadcast %cst_11 : f32 to vector<16x128xf32>
    %27 = arith.subf %25, %26 : vector<16x128xf32>
    %28 = arith.select %22, %20, %27 : vector<16x128xi1>, vector<16x128xf32>
    %29 = arith.mulf %28, %13 : vector<16x128xf32>
    %30 = vector.extract_strided_slice %29 {offsets = [0, 0], sizes = [8, 128], strides = [1, 1]} : vector<16x128xf32> to vector<8x128xf32>
    %31 = vector.extract_strided_slice %29 {offsets = [8, 0], sizes = [8, 128], strides = [1, 1]} : vector<16x128xf32> to vector<8x128xf32>
    %cst_12 = arith.constant dense<0.000000e+00> : vector<128xf32>
    %32 = vector.multi_reduction <add>, %30, %cst_12 [0] : vector<8x128xf32> to vector<128xf32>
    %33 = vector.shape_cast %32 : vector<128xf32> to vector<1x128xf32>
    %cst_13 = arith.constant dense<0.000000e+00> : vector<1xf32>
    %34 = vector.multi_reduction <add>, %33, %cst_13 [1] : vector<1x128xf32> to vector<1xf32>
    %35 = vector.shape_cast %34 : vector<1xf32> to vector<1x1xf32>
    %36 = vector.broadcast %4 : f32 to vector<1x1xf32>
    %37 = arith.addf %35, %36 : vector<1x1xf32>
    %cst_14 = arith.constant dense<0.000000e+00> : vector<128xf32>
    %38 = vector.multi_reduction <add>, %31, %cst_14 [0] : vector<8x128xf32> to vector<128xf32>
    %39 = vector.shape_cast %38 : vector<128xf32> to vector<1x128xf32>
    %cst_15 = arith.constant dense<0.000000e+00> : vector<1xf32>
    %40 = vector.multi_reduction <add>, %39, %cst_15 [1] : vector<1x128xf32> to vector<1xf32>
    %41 = vector.shape_cast %40 : vector<1xf32> to vector<1x1xf32>
    %42 = vector.broadcast %5 : f32 to vector<1x1xf32>
    %43 = arith.addf %41, %42 : vector<1x1xf32>
    %44 = arith.addf %17, %37 : vector<1x1xf32>
    %45 = vector.broadcast %44 : vector<1x1xf32> to vector<16x128xf32>
    %46 = arith.mulf %45, %9 : vector<16x128xf32>
    %47 = arith.addf %46, %16 : vector<16x128xf32>
    %cst_16 = arith.constant 0.000000e+00 : f32
    %48 = vector.broadcast %cst_16 : f32 to vector<16x128xf32>
    %49 = arith.cmpf ogt, %47, %48 : vector<16x128xf32>
    %cst_17 = arith.constant 0.000000e+00 : f32
    %50 = vector.broadcast %cst_17 : f32 to vector<16x128xf32>
    %51 = arith.minimumf %47, %50 : vector<16x128xf32>
    %52 = math.exp %51 : vector<16x128xf32>
    %cst_18 = arith.constant 1.000000e+00 : f32
    %53 = vector.broadcast %cst_18 : f32 to vector<16x128xf32>
    %54 = arith.subf %52, %53 : vector<16x128xf32>
    %55 = arith.select %49, %47, %54 : vector<16x128xi1>, vector<16x128xf32>
    %56 = arith.mulf %55, %13 : vector<16x128xf32>
    %57 = vector.extract_strided_slice %56 {offsets = [0, 0], sizes = [8, 128], strides = [1, 1]} : vector<16x128xf32> to vector<8x128xf32>
    %58 = vector.extract_strided_slice %56 {offsets = [8, 0], sizes = [8, 128], strides = [1, 1]} : vector<16x128xf32> to vector<8x128xf32>
    %cst_19 = arith.constant dense<0.000000e+00> : vector<128xf32>
    %59 = vector.multi_reduction <add>, %57, %cst_19 [0] : vector<8x128xf32> to vector<128xf32>
    %60 = vector.shape_cast %59 : vector<128xf32> to vector<1x128xf32>
    %cst_20 = arith.constant dense<0.000000e+00> : vector<1xf32>
    %61 = vector.multi_reduction <add>, %60, %cst_20 [1] : vector<1x128xf32> to vector<1xf32>
    %62 = vector.shape_cast %61 : vector<1xf32> to vector<1x1xf32>
    %63 = vector.broadcast %4 : f32 to vector<1x1xf32>
    %64 = arith.addf %62, %63 : vector<1x1xf32>
    %cst_21 = arith.constant dense<0.000000e+00> : vector<128xf32>
    %65 = vector.multi_reduction <add>, %58, %cst_21 [0] : vector<8x128xf32> to vector<128xf32>
    %66 = vector.shape_cast %65 : vector<128xf32> to vector<1x128xf32>
    %cst_22 = arith.constant dense<0.000000e+00> : vector<1xf32>
    %67 = vector.multi_reduction <add>, %66, %cst_22 [1] : vector<1x128xf32> to vector<1xf32>
    %68 = vector.shape_cast %67 : vector<1xf32> to vector<1x1xf32>
    %69 = vector.broadcast %5 : f32 to vector<1x1xf32>
    %70 = arith.addf %68, %69 : vector<1x1xf32>
    %71 = arith.addf %44, %64 : vector<1x1xf32>
    %72 = vector.broadcast %71 : vector<1x1xf32> to vector<16x128xf32>
    %73 = arith.mulf %72, %9 : vector<16x128xf32>
    %74 = arith.addf %73, %16 : vector<16x128xf32>
    %cst_23 = arith.constant 0.000000e+00 : f32
    %75 = vector.broadcast %cst_23 : f32 to vector<16x128xf32>
    %76 = arith.cmpf ogt, %74, %75 : vector<16x128xf32>
    %cst_24 = arith.constant 0.000000e+00 : f32
    %77 = vector.broadcast %cst_24 : f32 to vector<16x128xf32>
    %78 = arith.minimumf %74, %77 : vector<16x128xf32>
    %79 = math.exp %78 : vector<16x128xf32>
    %cst_25 = arith.constant 1.000000e+00 : f32
    %80 = vector.broadcast %cst_25 : f32 to vector<16x128xf32>
    %81 = arith.subf %79, %80 : vector<16x128xf32>
    %82 = arith.select %76, %74, %81 : vector<16x128xi1>, vector<16x128xf32>
    %83 = arith.mulf %82, %13 : vector<16x128xf32>
    %84 = vector.extract_strided_slice %83 {offsets = [0, 0], sizes = [8, 128], strides = [1, 1]} : vector<16x128xf32> to vector<8x128xf32>
    %85 = vector.extract_strided_slice %83 {offsets = [8, 0], sizes = [8, 128], strides = [1, 1]} : vector<16x128xf32> to vector<8x128xf32>
    %cst_26 = arith.constant dense<0.000000e+00> : vector<128xf32>
    %86 = vector.multi_reduction <add>, %84, %cst_26 [0] : vector<8x128xf32> to vector<128xf32>
    %87 = vector.shape_cast %86 : vector<128xf32> to vector<1x128xf32>
    %cst_27 = arith.constant dense<0.000000e+00> : vector<1xf32>
    %88 = vector.multi_reduction <add>, %87, %cst_27 [1] : vector<1x128xf32> to vector<1xf32>
    %89 = vector.shape_cast %88 : vector<1xf32> to vector<1x1xf32>
    %90 = vector.broadcast %4 : f32 to vector<1x1xf32>
    %91 = arith.addf %89, %90 : vector<1x1xf32>
    %cst_28 = arith.constant dense<0.000000e+00> : vector<128xf32>
    %92 = vector.multi_reduction <add>, %85, %cst_28 [0] : vector<8x128xf32> to vector<128xf32>
    %93 = vector.shape_cast %92 : vector<128xf32> to vector<1x128xf32>
    %cst_29 = arith.constant dense<0.000000e+00> : vector<1xf32>
    %94 = vector.multi_reduction <add>, %93, %cst_29 [1] : vector<1x128xf32> to vector<1xf32>
    %95 = vector.shape_cast %94 : vector<1xf32> to vector<1x1xf32>
    %96 = vector.broadcast %5 : f32 to vector<1x1xf32>
    %97 = arith.addf %95, %96 : vector<1x1xf32>
    %98 = arith.addf %71, %91 : vector<1x1xf32>
    %99 = vector.broadcast %98 : vector<1x1xf32> to vector<16x128xf32>
    %100 = arith.mulf %99, %9 : vector<16x128xf32>
    %101 = arith.addf %100, %16 : vector<16x128xf32>
    %cst_30 = arith.constant 0.000000e+00 : f32
    %102 = vector.broadcast %cst_30 : f32 to vector<16x128xf32>
    %103 = arith.cmpf ogt, %101, %102 : vector<16x128xf32>
    %cst_31 = arith.constant 0.000000e+00 : f32
    %104 = vector.broadcast %cst_31 : f32 to vector<16x128xf32>
    %105 = arith.minimumf %101, %104 : vector<16x128xf32>
    %106 = math.exp %105 : vector<16x128xf32>
    %cst_32 = arith.constant 1.000000e+00 : f32
    %107 = vector.broadcast %cst_32 : f32 to vector<16x128xf32>
    %108 = arith.subf %106, %107 : vector<16x128xf32>
    %109 = arith.select %103, %101, %108 : vector<16x128xi1>, vector<16x128xf32>
    %110 = arith.mulf %109, %13 : vector<16x128xf32>
    %111 = vector.extract_strided_slice %110 {offsets = [0, 0], sizes = [8, 128], strides = [1, 1]} : vector<16x128xf32> to vector<8x128xf32>
    %112 = vector.extract_strided_slice %110 {offsets = [8, 0], sizes = [8, 128], strides = [1, 1]} : vector<16x128xf32> to vector<8x128xf32>
    %cst_33 = arith.constant dense<0.000000e+00> : vector<128xf32>
    %113 = vector.multi_reduction <add>, %111, %cst_33 [0] : vector<8x128xf32> to vector<128xf32>
    %114 = vector.shape_cast %113 : vector<128xf32> to vector<1x128xf32>
    %cst_34 = arith.constant dense<0.000000e+00> : vector<1xf32>
    %115 = vector.multi_reduction <add>, %114, %cst_34 [1] : vector<1x128xf32> to vector<1xf32>
    %116 = vector.shape_cast %115 : vector<1xf32> to vector<1x1xf32>
    %117 = vector.broadcast %4 : f32 to vector<1x1xf32>
    %118 = arith.addf %116, %117 : vector<1x1xf32>
    %cst_35 = arith.constant dense<0.000000e+00> : vector<128xf32>
    %119 = vector.multi_reduction <add>, %112, %cst_35 [0] : vector<8x128xf32> to vector<128xf32>
    %120 = vector.shape_cast %119 : vector<128xf32> to vector<1x128xf32>
    %cst_36 = arith.constant dense<0.000000e+00> : vector<1xf32>
    %121 = vector.multi_reduction <add>, %120, %cst_36 [1] : vector<1x128xf32> to vector<1xf32>
    %122 = vector.shape_cast %121 : vector<1xf32> to vector<1x1xf32>
    %123 = vector.broadcast %5 : f32 to vector<1x1xf32>
    %124 = arith.addf %122, %123 : vector<1x1xf32>
    %125 = arith.addf %98, %118 : vector<1x1xf32>
    %126 = vector.broadcast %125 : vector<1x1xf32> to vector<16x128xf32>
    %127 = arith.mulf %126, %9 : vector<16x128xf32>
    %128 = arith.addf %127, %16 : vector<16x128xf32>
    %cst_37 = arith.constant 0.000000e+00 : f32
    %129 = vector.broadcast %cst_37 : f32 to vector<16x128xf32>
    %130 = arith.cmpf ogt, %128, %129 : vector<16x128xf32>
    %cst_38 = arith.constant 0.000000e+00 : f32
    %131 = vector.broadcast %cst_38 : f32 to vector<16x128xf32>
    %132 = arith.minimumf %128, %131 : vector<16x128xf32>
    %133 = math.exp %132 : vector<16x128xf32>
    %cst_39 = arith.constant 1.000000e+00 : f32
    %134 = vector.broadcast %cst_39 : f32 to vector<16x128xf32>
    %135 = arith.subf %133, %134 : vector<16x128xf32>
    %136 = arith.select %130, %128, %135 : vector<16x128xi1>, vector<16x128xf32>
    %137 = arith.mulf %136, %13 : vector<16x128xf32>
    %138 = vector.extract_strided_slice %137 {offsets = [0, 0], sizes = [8, 128], strides = [1, 1]} : vector<16x128xf32> to vector<8x128xf32>
    %139 = vector.extract_strided_slice %137 {offsets = [8, 0], sizes = [8, 128], strides = [1, 1]} : vector<16x128xf32> to vector<8x128xf32>
    %cst_40 = arith.constant dense<0.000000e+00> : vector<128xf32>
    %140 = vector.multi_reduction <add>, %138, %cst_40 [0] : vector<8x128xf32> to vector<128xf32>
    %141 = vector.shape_cast %140 : vector<128xf32> to vector<1x128xf32>
    %cst_41 = arith.constant dense<0.000000e+00> : vector<1xf32>
    %142 = vector.multi_reduction <add>, %141, %cst_41 [1] : vector<1x128xf32> to vector<1xf32>
    %143 = vector.shape_cast %142 : vector<1xf32> to vector<1x1xf32>
    %144 = vector.broadcast %4 : f32 to vector<1x1xf32>
    %145 = arith.addf %143, %144 : vector<1x1xf32>
    %cst_42 = arith.constant dense<0.000000e+00> : vector<128xf32>
    %146 = vector.multi_reduction <add>, %139, %cst_42 [0] : vector<8x128xf32> to vector<128xf32>
    %147 = vector.shape_cast %146 : vector<128xf32> to vector<1x128xf32>
    %cst_43 = arith.constant dense<0.000000e+00> : vector<1xf32>
    %148 = vector.multi_reduction <add>, %147, %cst_43 [1] : vector<1x128xf32> to vector<1xf32>
    %149 = vector.shape_cast %148 : vector<1xf32> to vector<1x1xf32>
    %150 = vector.broadcast %5 : f32 to vector<1x1xf32>
    %151 = arith.addf %149, %150 : vector<1x1xf32>
    %152 = arith.addf %125, %145 : vector<1x1xf32>
    %153 = vector.broadcast %152 : vector<1x1xf32> to vector<16x128xf32>
    %154 = arith.mulf %153, %9 : vector<16x128xf32>
    %155 = arith.addf %154, %16 : vector<16x128xf32>
    %cst_44 = arith.constant 0.000000e+00 : f32
    %156 = vector.broadcast %cst_44 : f32 to vector<16x128xf32>
    %157 = arith.cmpf ogt, %155, %156 : vector<16x128xf32>
    %cst_45 = arith.constant 0.000000e+00 : f32
    %158 = vector.broadcast %cst_45 : f32 to vector<16x128xf32>
    %159 = arith.minimumf %155, %158 : vector<16x128xf32>
    %160 = math.exp %159 : vector<16x128xf32>
    %cst_46 = arith.constant 1.000000e+00 : f32
    %161 = vector.broadcast %cst_46 : f32 to vector<16x128xf32>
    %162 = arith.subf %160, %161 : vector<16x128xf32>
    %163 = arith.select %157, %155, %162 : vector<16x128xi1>, vector<16x128xf32>
    %164 = arith.mulf %163, %13 : vector<16x128xf32>
    %165 = vector.extract_strided_slice %164 {offsets = [0, 0], sizes = [8, 128], strides = [1, 1]} : vector<16x128xf32> to vector<8x128xf32>
    %166 = vector.extract_strided_slice %164 {offsets = [8, 0], sizes = [8, 128], strides = [1, 1]} : vector<16x128xf32> to vector<8x128xf32>
    %cst_47 = arith.constant dense<0.000000e+00> : vector<128xf32>
    %167 = vector.multi_reduction <add>, %165, %cst_47 [0] : vector<8x128xf32> to vector<128xf32>
    %168 = vector.shape_cast %167 : vector<128xf32> to vector<1x128xf32>
    %cst_48 = arith.constant dense<0.000000e+00> : vector<1xf32>
    %169 = vector.multi_reduction <add>, %168, %cst_48 [1] : vector<1x128xf32> to vector<1xf32>
    %170 = vector.shape_cast %169 : vector<1xf32> to vector<1x1xf32>
    %171 = vector.broadcast %4 : f32 to vector<1x1xf32>
    %172 = arith.addf %170, %171 : vector<1x1xf32>
    %cst_49 = arith.constant dense<0.000000e+00> : vector<128xf32>
    %173 = vector.multi_reduction <add>, %166, %cst_49 [0] : vector<8x128xf32> to vector<128xf32>
    %174 = vector.shape_cast %173 : vector<128xf32> to vector<1x128xf32>
    %cst_50 = arith.constant dense<0.000000e+00> : vector<1xf32>
    %175 = vector.multi_reduction <add>, %174, %cst_50 [1] : vector<1x128xf32> to vector<1xf32>
    %176 = vector.shape_cast %175 : vector<1xf32> to vector<1x1xf32>
    %177 = vector.broadcast %5 : f32 to vector<1x1xf32>
    %178 = arith.addf %176, %177 : vector<1x1xf32>
    %179 = arith.addf %152, %172 : vector<1x1xf32>
    %180 = vector.broadcast %179 : vector<1x1xf32> to vector<16x128xf32>
    %181 = arith.mulf %180, %9 : vector<16x128xf32>
    %182 = arith.addf %181, %16 : vector<16x128xf32>
    %cst_51 = arith.constant 0.000000e+00 : f32
    %183 = vector.broadcast %cst_51 : f32 to vector<16x128xf32>
    %184 = arith.cmpf ogt, %182, %183 : vector<16x128xf32>
    %cst_52 = arith.constant 0.000000e+00 : f32
    %185 = vector.broadcast %cst_52 : f32 to vector<16x128xf32>
    %186 = arith.minimumf %182, %185 : vector<16x128xf32>
    %187 = math.exp %186 : vector<16x128xf32>
    %cst_53 = arith.constant 1.000000e+00 : f32
    %188 = vector.broadcast %cst_53 : f32 to vector<16x128xf32>
    %189 = arith.subf %187, %188 : vector<16x128xf32>
    %190 = arith.select %184, %182, %189 : vector<16x128xi1>, vector<16x128xf32>
    %191 = arith.mulf %190, %13 : vector<16x128xf32>
    %192 = vector.extract_strided_slice %191 {offsets = [0, 0], sizes = [8, 128], strides = [1, 1]} : vector<16x128xf32> to vector<8x128xf32>
    %193 = vector.extract_strided_slice %191 {offsets = [8, 0], sizes = [8, 128], strides = [1, 1]} : vector<16x128xf32> to vector<8x128xf32>
    %cst_54 = arith.constant dense<0.000000e+00> : vector<128xf32>
    %194 = vector.multi_reduction <add>, %192, %cst_54 [0] : vector<8x128xf32> to vector<128xf32>
    %195 = vector.shape_cast %194 : vector<128xf32> to vector<1x128xf32>
    %cst_55 = arith.constant dense<0.000000e+00> : vector<1xf32>
    %196 = vector.multi_reduction <add>, %195, %cst_55 [1] : vector<1x128xf32> to vector<1xf32>
    %197 = vector.shape_cast %196 : vector<1xf32> to vector<1x1xf32>
    %198 = vector.broadcast %4 : f32 to vector<1x1xf32>
    %199 = arith.addf %197, %198 : vector<1x1xf32>
    %cst_56 = arith.constant dense<0.000000e+00> : vector<128xf32>
    %200 = vector.multi_reduction <add>, %193, %cst_56 [0] : vector<8x128xf32> to vector<128xf32>
    %201 = vector.shape_cast %200 : vector<128xf32> to vector<1x128xf32>
    %cst_57 = arith.constant dense<0.000000e+00> : vector<1xf32>
    %202 = vector.multi_reduction <add>, %201, %cst_57 [1] : vector<1x128xf32> to vector<1xf32>
    %203 = vector.shape_cast %202 : vector<1xf32> to vector<1x1xf32>
    %204 = vector.broadcast %5 : f32 to vector<1x1xf32>
    %205 = arith.addf %203, %204 : vector<1x1xf32>
    %206 = arith.addf %179, %199 : vector<1x1xf32>
    %207 = vector.broadcast %206 : vector<1x1xf32> to vector<16x128xf32>
    %208 = arith.mulf %207, %9 : vector<16x128xf32>
    %209 = arith.addf %208, %16 : vector<16x128xf32>
    %cst_58 = arith.constant 0.000000e+00 : f32
    %210 = vector.broadcast %cst_58 : f32 to vector<16x128xf32>
    %211 = arith.cmpf ogt, %209, %210 : vector<16x128xf32>
    %cst_59 = arith.constant 0.000000e+00 : f32
    %212 = vector.broadcast %cst_59 : f32 to vector<16x128xf32>
    %213 = arith.minimumf %209, %212 : vector<16x128xf32>
    %214 = math.exp %213 : vector<16x128xf32>
    %cst_60 = arith.constant 1.000000e+00 : f32
    %215 = vector.broadcast %cst_60 : f32 to vector<16x128xf32>
    %216 = arith.subf %214, %215 : vector<16x128xf32>
    %217 = arith.select %211, %209, %216 : vector<16x128xi1>, vector<16x128xf32>
    %218 = arith.mulf %217, %13 : vector<16x128xf32>
    %219 = vector.extract_strided_slice %218 {offsets = [0, 0], sizes = [8, 128], strides = [1, 1]} : vector<16x128xf32> to vector<8x128xf32>
    %220 = vector.extract_strided_slice %218 {offsets = [8, 0], sizes = [8, 128], strides = [1, 1]} : vector<16x128xf32> to vector<8x128xf32>
    %cst_61 = arith.constant dense<0.000000e+00> : vector<128xf32>
    %221 = vector.multi_reduction <add>, %219, %cst_61 [0] : vector<8x128xf32> to vector<128xf32>
    %222 = vector.shape_cast %221 : vector<128xf32> to vector<1x128xf32>
    %cst_62 = arith.constant dense<0.000000e+00> : vector<1xf32>
    %223 = vector.multi_reduction <add>, %222, %cst_62 [1] : vector<1x128xf32> to vector<1xf32>
    %224 = vector.shape_cast %223 : vector<1xf32> to vector<1x1xf32>
    %225 = vector.broadcast %4 : f32 to vector<1x1xf32>
    %226 = arith.addf %224, %225 : vector<1x1xf32>
    %cst_63 = arith.constant dense<0.000000e+00> : vector<128xf32>
    %227 = vector.multi_reduction <add>, %220, %cst_63 [0] : vector<8x128xf32> to vector<128xf32>
    %228 = vector.shape_cast %227 : vector<128xf32> to vector<1x128xf32>
    %cst_64 = arith.constant dense<0.000000e+00> : vector<1xf32>
    %229 = vector.multi_reduction <add>, %228, %cst_64 [1] : vector<1x128xf32> to vector<1xf32>
    %230 = vector.shape_cast %229 : vector<1xf32> to vector<1x1xf32>
    %231 = vector.broadcast %5 : f32 to vector<1x1xf32>
    %232 = arith.addf %230, %231 : vector<1x1xf32>
    %233 = arith.addf %206, %226 : vector<1x1xf32>
    %234 = vector.broadcast %233 : vector<1x1xf32> to vector<16x128xf32>
    %235 = arith.mulf %234, %9 : vector<16x128xf32>
    %236 = arith.addf %235, %16 : vector<16x128xf32>
    %cst_65 = arith.constant 0.000000e+00 : f32
    %237 = vector.broadcast %cst_65 : f32 to vector<16x128xf32>
    %238 = arith.cmpf ogt, %236, %237 : vector<16x128xf32>
    %cst_66 = arith.constant 0.000000e+00 : f32
    %239 = vector.broadcast %cst_66 : f32 to vector<16x128xf32>
    %240 = arith.minimumf %236, %239 : vector<16x128xf32>
    %241 = math.exp %240 : vector<16x128xf32>
    %cst_67 = arith.constant 1.000000e+00 : f32
    %242 = vector.broadcast %cst_67 : f32 to vector<16x128xf32>
    %243 = arith.subf %241, %242 : vector<16x128xf32>
    %244 = arith.select %238, %236, %243 : vector<16x128xi1>, vector<16x128xf32>
    %245 = arith.mulf %244, %13 : vector<16x128xf32>
    %246 = vector.extract_strided_slice %245 {offsets = [0, 0], sizes = [8, 128], strides = [1, 1]} : vector<16x128xf32> to vector<8x128xf32>
    %247 = vector.extract_strided_slice %245 {offsets = [8, 0], sizes = [8, 128], strides = [1, 1]} : vector<16x128xf32> to vector<8x128xf32>
    %cst_68 = arith.constant dense<0.000000e+00> : vector<128xf32>
    %248 = vector.multi_reduction <add>, %246, %cst_68 [0] : vector<8x128xf32> to vector<128xf32>
    %249 = vector.shape_cast %248 : vector<128xf32> to vector<1x128xf32>
    %cst_69 = arith.constant dense<0.000000e+00> : vector<1xf32>
    %250 = vector.multi_reduction <add>, %249, %cst_69 [1] : vector<1x128xf32> to vector<1xf32>
    %251 = vector.shape_cast %250 : vector<1xf32> to vector<1x1xf32>
    %252 = vector.broadcast %4 : f32 to vector<1x1xf32>
    %253 = arith.addf %251, %252 : vector<1x1xf32>
    %cst_70 = arith.constant dense<0.000000e+00> : vector<128xf32>
    %254 = vector.multi_reduction <add>, %247, %cst_70 [0] : vector<8x128xf32> to vector<128xf32>
    %255 = vector.shape_cast %254 : vector<128xf32> to vector<1x128xf32>
    %cst_71 = arith.constant dense<0.000000e+00> : vector<1xf32>
    %256 = vector.multi_reduction <add>, %255, %cst_71 [1] : vector<1x128xf32> to vector<1xf32>
    %257 = vector.shape_cast %256 : vector<1xf32> to vector<1x1xf32>
    %258 = vector.broadcast %5 : f32 to vector<1x1xf32>
    %259 = arith.addf %257, %258 : vector<1x1xf32>
    %260 = arith.addf %233, %253 : vector<1x1xf32>
    %261 = vector.broadcast %260 : vector<1x1xf32> to vector<16x128xf32>
    %262 = arith.mulf %261, %9 : vector<16x128xf32>
    %263 = arith.addf %262, %16 : vector<16x128xf32>
    %cst_72 = arith.constant 0.000000e+00 : f32
    %264 = vector.broadcast %cst_72 : f32 to vector<16x128xf32>
    %265 = arith.cmpf ogt, %263, %264 : vector<16x128xf32>
    %cst_73 = arith.constant 0.000000e+00 : f32
    %266 = vector.broadcast %cst_73 : f32 to vector<16x128xf32>
    %267 = arith.minimumf %263, %266 : vector<16x128xf32>
    %268 = math.exp %267 : vector<16x128xf32>
    %cst_74 = arith.constant 1.000000e+00 : f32
    %269 = vector.broadcast %cst_74 : f32 to vector<16x128xf32>
    %270 = arith.subf %268, %269 : vector<16x128xf32>
    %271 = arith.select %265, %263, %270 : vector<16x128xi1>, vector<16x128xf32>
    %272 = arith.mulf %271, %13 : vector<16x128xf32>
    %273 = vector.extract_strided_slice %272 {offsets = [0, 0], sizes = [8, 128], strides = [1, 1]} : vector<16x128xf32> to vector<8x128xf32>
    %274 = vector.extract_strided_slice %272 {offsets = [8, 0], sizes = [8, 128], strides = [1, 1]} : vector<16x128xf32> to vector<8x128xf32>
    %cst_75 = arith.constant dense<0.000000e+00> : vector<128xf32>
    %275 = vector.multi_reduction <add>, %273, %cst_75 [0] : vector<8x128xf32> to vector<128xf32>
    %276 = vector.shape_cast %275 : vector<128xf32> to vector<1x128xf32>
    %cst_76 = arith.constant dense<0.000000e+00> : vector<1xf32>
    %277 = vector.multi_reduction <add>, %276, %cst_76 [1] : vector<1x128xf32> to vector<1xf32>
    %278 = vector.shape_cast %277 : vector<1xf32> to vector<1x1xf32>
    %279 = vector.broadcast %4 : f32 to vector<1x1xf32>
    %280 = arith.addf %278, %279 : vector<1x1xf32>
    %cst_77 = arith.constant dense<0.000000e+00> : vector<128xf32>
    %281 = vector.multi_reduction <add>, %274, %cst_77 [0] : vector<8x128xf32> to vector<128xf32>
    %282 = vector.shape_cast %281 : vector<128xf32> to vector<1x128xf32>
    %cst_78 = arith.constant dense<0.000000e+00> : vector<1xf32>
    %283 = vector.multi_reduction <add>, %282, %cst_78 [1] : vector<1x128xf32> to vector<1xf32>
    %284 = vector.shape_cast %283 : vector<1xf32> to vector<1x1xf32>
    %285 = vector.broadcast %5 : f32 to vector<1x1xf32>
    %286 = arith.addf %284, %285 : vector<1x1xf32>
    %287 = arith.addf %260, %280 : vector<1x1xf32>
    %288 = vector.broadcast %287 : vector<1x1xf32> to vector<16x128xf32>
    %289 = arith.mulf %288, %9 : vector<16x128xf32>
    %290 = arith.addf %289, %16 : vector<16x128xf32>
    %cst_79 = arith.constant 0.000000e+00 : f32
    %291 = vector.broadcast %cst_79 : f32 to vector<16x128xf32>
    %292 = arith.cmpf ogt, %290, %291 : vector<16x128xf32>
    %cst_80 = arith.constant 0.000000e+00 : f32
    %293 = vector.broadcast %cst_80 : f32 to vector<16x128xf32>
    %294 = arith.minimumf %290, %293 : vector<16x128xf32>
    %295 = math.exp %294 : vector<16x128xf32>
    %cst_81 = arith.constant 1.000000e+00 : f32
    %296 = vector.broadcast %cst_81 : f32 to vector<16x128xf32>
    %297 = arith.subf %295, %296 : vector<16x128xf32>
    %298 = arith.select %292, %290, %297 : vector<16x128xi1>, vector<16x128xf32>
    %299 = arith.mulf %298, %13 : vector<16x128xf32>
    %300 = vector.extract_strided_slice %299 {offsets = [8, 0], sizes = [8, 128], strides = [1, 1]} : vector<16x128xf32> to vector<8x128xf32>
    %cst_82 = arith.constant dense<0.000000e+00> : vector<128xf32>
    %301 = vector.multi_reduction <add>, %300, %cst_82 [0] : vector<8x128xf32> to vector<128xf32>
    %302 = vector.shape_cast %301 : vector<128xf32> to vector<1x128xf32>
    %cst_83 = arith.constant dense<0.000000e+00> : vector<1xf32>
    %303 = vector.multi_reduction <add>, %302, %cst_83 [1] : vector<1x128xf32> to vector<1xf32>
    %304 = vector.shape_cast %303 : vector<1xf32> to vector<1x1xf32>
    %305 = vector.broadcast %5 : f32 to vector<1x1xf32>
    %306 = arith.addf %304, %305 : vector<1x1xf32>
    %307 = tpu.iota {dimensions = array<i32: 1>} : vector<1x128xi32>
    %cst_84 = arith.constant 0.000000e+00 : f32
    %308 = vector.broadcast %cst_84 : f32 to vector<1x128xf32>
    %cst_85 = arith.constant 0.000000e+00 : f32
    %309 = vector.broadcast %cst_85 : f32 to vector<1x128xf32>
    %c0_i32 = arith.constant 0 : i32
    %310 = vector.broadcast %c0_i32 : i32 to vector<1x128xi32>
    %311 = arith.cmpi eq, %307, %310 : vector<1x128xi32>
    %312 = vector.shape_cast %17 : vector<1x1xf32> to vector<1x1xf32>
    %313 = vector.broadcast %312 : vector<1x1xf32> to vector<1x128xf32>
    %314 = arith.select %311, %313, %308 : vector<1x128xi1>, vector<1x128xf32>
    %c0_i32_86 = arith.constant 0 : i32
    %315 = vector.broadcast %c0_i32_86 : i32 to vector<1x128xi32>
    %316 = arith.cmpi eq, %307, %315 : vector<1x128xi32>
    %317 = vector.shape_cast %43 : vector<1x1xf32> to vector<1x1xf32>
    %318 = vector.broadcast %317 : vector<1x1xf32> to vector<1x128xf32>
    %319 = arith.select %316, %318, %309 : vector<1x128xi1>, vector<1x128xf32>
    %c1_i32 = arith.constant 1 : i32
    %320 = vector.broadcast %c1_i32 : i32 to vector<1x128xi32>
    %321 = arith.cmpi eq, %307, %320 : vector<1x128xi32>
    %322 = vector.shape_cast %44 : vector<1x1xf32> to vector<1x1xf32>
    %323 = vector.broadcast %322 : vector<1x1xf32> to vector<1x128xf32>
    %324 = arith.select %321, %323, %314 : vector<1x128xi1>, vector<1x128xf32>
    %c1_i32_87 = arith.constant 1 : i32
    %325 = vector.broadcast %c1_i32_87 : i32 to vector<1x128xi32>
    %326 = arith.cmpi eq, %307, %325 : vector<1x128xi32>
    %327 = vector.shape_cast %70 : vector<1x1xf32> to vector<1x1xf32>
    %328 = vector.broadcast %327 : vector<1x1xf32> to vector<1x128xf32>
    %329 = arith.select %326, %328, %319 : vector<1x128xi1>, vector<1x128xf32>
    %c2_i32 = arith.constant 2 : i32
    %330 = vector.broadcast %c2_i32 : i32 to vector<1x128xi32>
    %331 = arith.cmpi eq, %307, %330 : vector<1x128xi32>
    %332 = vector.shape_cast %71 : vector<1x1xf32> to vector<1x1xf32>
    %333 = vector.broadcast %332 : vector<1x1xf32> to vector<1x128xf32>
    %334 = arith.select %331, %333, %324 : vector<1x128xi1>, vector<1x128xf32>
    %c2_i32_88 = arith.constant 2 : i32
    %335 = vector.broadcast %c2_i32_88 : i32 to vector<1x128xi32>
    %336 = arith.cmpi eq, %307, %335 : vector<1x128xi32>
    %337 = vector.shape_cast %97 : vector<1x1xf32> to vector<1x1xf32>
    %338 = vector.broadcast %337 : vector<1x1xf32> to vector<1x128xf32>
    %339 = arith.select %336, %338, %329 : vector<1x128xi1>, vector<1x128xf32>
    %c3_i32 = arith.constant 3 : i32
    %340 = vector.broadcast %c3_i32 : i32 to vector<1x128xi32>
    %341 = arith.cmpi eq, %307, %340 : vector<1x128xi32>
    %342 = vector.shape_cast %98 : vector<1x1xf32> to vector<1x1xf32>
    %343 = vector.broadcast %342 : vector<1x1xf32> to vector<1x128xf32>
    %344 = arith.select %341, %343, %334 : vector<1x128xi1>, vector<1x128xf32>
    %c3_i32_89 = arith.constant 3 : i32
    %345 = vector.broadcast %c3_i32_89 : i32 to vector<1x128xi32>
    %346 = arith.cmpi eq, %307, %345 : vector<1x128xi32>
    %347 = vector.shape_cast %124 : vector<1x1xf32> to vector<1x1xf32>
    %348 = vector.broadcast %347 : vector<1x1xf32> to vector<1x128xf32>
    %349 = arith.select %346, %348, %339 : vector<1x128xi1>, vector<1x128xf32>
    %c4_i32 = arith.constant 4 : i32
    %350 = vector.broadcast %c4_i32 : i32 to vector<1x128xi32>
    %351 = arith.cmpi eq, %307, %350 : vector<1x128xi32>
    %352 = vector.shape_cast %125 : vector<1x1xf32> to vector<1x1xf32>
    %353 = vector.broadcast %352 : vector<1x1xf32> to vector<1x128xf32>
    %354 = arith.select %351, %353, %344 : vector<1x128xi1>, vector<1x128xf32>
    %c4_i32_90 = arith.constant 4 : i32
    %355 = vector.broadcast %c4_i32_90 : i32 to vector<1x128xi32>
    %356 = arith.cmpi eq, %307, %355 : vector<1x128xi32>
    %357 = vector.shape_cast %151 : vector<1x1xf32> to vector<1x1xf32>
    %358 = vector.broadcast %357 : vector<1x1xf32> to vector<1x128xf32>
    %359 = arith.select %356, %358, %349 : vector<1x128xi1>, vector<1x128xf32>
    %c5_i32 = arith.constant 5 : i32
    %360 = vector.broadcast %c5_i32 : i32 to vector<1x128xi32>
    %361 = arith.cmpi eq, %307, %360 : vector<1x128xi32>
    %362 = vector.shape_cast %152 : vector<1x1xf32> to vector<1x1xf32>
    %363 = vector.broadcast %362 : vector<1x1xf32> to vector<1x128xf32>
    %364 = arith.select %361, %363, %354 : vector<1x128xi1>, vector<1x128xf32>
    %c5_i32_91 = arith.constant 5 : i32
    %365 = vector.broadcast %c5_i32_91 : i32 to vector<1x128xi32>
    %366 = arith.cmpi eq, %307, %365 : vector<1x128xi32>
    %367 = vector.shape_cast %178 : vector<1x1xf32> to vector<1x1xf32>
    %368 = vector.broadcast %367 : vector<1x1xf32> to vector<1x128xf32>
    %369 = arith.select %366, %368, %359 : vector<1x128xi1>, vector<1x128xf32>
    %c6_i32 = arith.constant 6 : i32
    %370 = vector.broadcast %c6_i32 : i32 to vector<1x128xi32>
    %371 = arith.cmpi eq, %307, %370 : vector<1x128xi32>
    %372 = vector.shape_cast %179 : vector<1x1xf32> to vector<1x1xf32>
    %373 = vector.broadcast %372 : vector<1x1xf32> to vector<1x128xf32>
    %374 = arith.select %371, %373, %364 : vector<1x128xi1>, vector<1x128xf32>
    %c6_i32_92 = arith.constant 6 : i32
    %375 = vector.broadcast %c6_i32_92 : i32 to vector<1x128xi32>
    %376 = arith.cmpi eq, %307, %375 : vector<1x128xi32>
    %377 = vector.shape_cast %205 : vector<1x1xf32> to vector<1x1xf32>
    %378 = vector.broadcast %377 : vector<1x1xf32> to vector<1x128xf32>
    %379 = arith.select %376, %378, %369 : vector<1x128xi1>, vector<1x128xf32>
    %c7_i32 = arith.constant 7 : i32
    %380 = vector.broadcast %c7_i32 : i32 to vector<1x128xi32>
    %381 = arith.cmpi eq, %307, %380 : vector<1x128xi32>
    %382 = vector.shape_cast %206 : vector<1x1xf32> to vector<1x1xf32>
    %383 = vector.broadcast %382 : vector<1x1xf32> to vector<1x128xf32>
    %384 = arith.select %381, %383, %374 : vector<1x128xi1>, vector<1x128xf32>
    %c7_i32_93 = arith.constant 7 : i32
    %385 = vector.broadcast %c7_i32_93 : i32 to vector<1x128xi32>
    %386 = arith.cmpi eq, %307, %385 : vector<1x128xi32>
    %387 = vector.shape_cast %232 : vector<1x1xf32> to vector<1x1xf32>
    %388 = vector.broadcast %387 : vector<1x1xf32> to vector<1x128xf32>
    %389 = arith.select %386, %388, %379 : vector<1x128xi1>, vector<1x128xf32>
    %c8_i32 = arith.constant 8 : i32
    %390 = vector.broadcast %c8_i32 : i32 to vector<1x128xi32>
    %391 = arith.cmpi eq, %307, %390 : vector<1x128xi32>
    %392 = vector.shape_cast %233 : vector<1x1xf32> to vector<1x1xf32>
    %393 = vector.broadcast %392 : vector<1x1xf32> to vector<1x128xf32>
    %394 = arith.select %391, %393, %384 : vector<1x128xi1>, vector<1x128xf32>
    %c8_i32_94 = arith.constant 8 : i32
    %395 = vector.broadcast %c8_i32_94 : i32 to vector<1x128xi32>
    %396 = arith.cmpi eq, %307, %395 : vector<1x128xi32>
    %397 = vector.shape_cast %259 : vector<1x1xf32> to vector<1x1xf32>
    %398 = vector.broadcast %397 : vector<1x1xf32> to vector<1x128xf32>
    %399 = arith.select %396, %398, %389 : vector<1x128xi1>, vector<1x128xf32>
    %c9_i32 = arith.constant 9 : i32
    %400 = vector.broadcast %c9_i32 : i32 to vector<1x128xi32>
    %401 = arith.cmpi eq, %307, %400 : vector<1x128xi32>
    %402 = vector.shape_cast %260 : vector<1x1xf32> to vector<1x1xf32>
    %403 = vector.broadcast %402 : vector<1x1xf32> to vector<1x128xf32>
    %404 = arith.select %401, %403, %394 : vector<1x128xi1>, vector<1x128xf32>
    %c9_i32_95 = arith.constant 9 : i32
    %405 = vector.broadcast %c9_i32_95 : i32 to vector<1x128xi32>
    %406 = arith.cmpi eq, %307, %405 : vector<1x128xi32>
    %407 = vector.shape_cast %286 : vector<1x1xf32> to vector<1x1xf32>
    %408 = vector.broadcast %407 : vector<1x1xf32> to vector<1x128xf32>
    %409 = arith.select %406, %408, %399 : vector<1x128xi1>, vector<1x128xf32>
    %c10_i32 = arith.constant 10 : i32
    %410 = vector.broadcast %c10_i32 : i32 to vector<1x128xi32>
    %411 = arith.cmpi eq, %307, %410 : vector<1x128xi32>
    %412 = vector.shape_cast %287 : vector<1x1xf32> to vector<1x1xf32>
    %413 = vector.broadcast %412 : vector<1x1xf32> to vector<1x128xf32>
    %414 = arith.select %411, %413, %404 : vector<1x128xi1>, vector<1x128xf32>
    %c10_i32_96 = arith.constant 10 : i32
    %415 = vector.broadcast %c10_i32_96 : i32 to vector<1x128xi32>
    %416 = arith.cmpi eq, %307, %415 : vector<1x128xi32>
    %417 = vector.shape_cast %306 : vector<1x1xf32> to vector<1x1xf32>
    %418 = vector.broadcast %417 : vector<1x1xf32> to vector<1x128xf32>
    %419 = arith.select %416, %418, %409 : vector<1x128xi1>, vector<1x128xf32>
    %c0_97 = arith.constant 0 : index
    %c0_98 = arith.constant 0 : index
    %c0_99 = arith.constant 0 : index
    %420 = vector.load %arg5[%c0_97, %c0_98, %c0_99] : memref<1x2x128xf32, #tpu.memory_space<vmem>>, vector<1x1x128xf32>
    %421 = vector.shape_cast %420 : vector<1x1x128xf32> to vector<1x128xf32>
    %422 = vector.shape_cast %414 : vector<1x128xf32> to vector<1x1x128xf32>
    tpu.vector_store %arg5[%c0_97, %c0_98, %c0_99], %422 {strides = array<i32>} : memref<1x2x128xf32, #tpu.memory_space<vmem>>, vector<1x1x128xf32>,
    %c0_100 = arith.constant 0 : index
    %c1_101 = arith.constant 1 : index
    %c0_102 = arith.constant 0 : index
    %423 = vector.load %arg5[%c0_100, %c1_101, %c0_102] : memref<1x2x128xf32, #tpu.memory_space<vmem>>, vector<1x1x128xf32>
    %424 = vector.shape_cast %423 : vector<1x1x128xf32> to vector<1x128xf32>
    %425 = vector.shape_cast %419 : vector<1x128xf32> to vector<1x1x128xf32>
    tpu.vector_store %arg5[%c0_100, %c1_101, %c0_102], %425 {strides = array<i32>} : memref<1x2x128xf32, #tpu.memory_space<vmem>>, vector<1x1x128xf32>,
    return
  }
  func.func @transform_0(%arg0: i32) -> i32 {
    %c0_i32 = arith.constant 0 : i32
    %c0_i32_0 = arith.constant 0 : i32
    return %c0_i32 : i32
  }
  func.func @transform_1(%arg0: i32) -> i32 {
    %c0_i32 = arith.constant 0 : i32
    %c0_i32_0 = arith.constant 0 : i32
    return %c0_i32 : i32
  }
  func.func @transform_2(%arg0: i32) -> i32 {
    %c0_i32 = arith.constant 0 : i32
    %c0_i32_0 = arith.constant 0 : i32
    return %c0_i32 : i32
  }
  func.func @transform_3(%arg0: i32) -> (i32, i32, i32) {
    %c0_i32 = arith.constant 0 : i32
    %c0_i32_0 = arith.constant 0 : i32
    %c0_i32_1 = arith.constant 0 : i32
    %c0_i32_2 = arith.constant 0 : i32
    return %c0_i32, %c0_i32_0, %c0_i32_1 : i32, i32, i32
  }
  func.func @transform_4(%arg0: i32) -> (i32, i32, i32) {
    %c0_i32 = arith.constant 0 : i32
    %c0_i32_0 = arith.constant 0 : i32
    %c0_i32_1 = arith.constant 0 : i32
    return %arg0, %c0_i32, %c0_i32_0 : i32, i32, i32
  }
}

</mosaic_0001>

<llo_original>
// kernel: fwd.1
$region0: #{fwd.1}
  #allocation0 [shape = 'u32[]', space=smem, size = 0x4, offset = 0x4, fixed_abs, tag = 'smem constant byte address 0x4 - core index']
  #allocation1 [shape = 'u32[72,128]{1,0:T(1,128)}', space=vmem, size = 0x9000, scoped, tag = 'internal scratch']
  #allocation2 [shape = 'f32[1]{0:T(128)S(6)}', space=smem, size = 0x200, scoped, tag = 'scoped memory for fwd.1']
  #allocation3 [shape = 'f32[1]{0:T(128)S(6)}', space=smem, size = 0x200, scoped, tag = 'scoped memory for fwd.1']
  %s0 = inlined_call_operand.<no memory space> [shape: f32[1], index: 0, kind: input, shape index: {}]
  %s1 = inlined_call_operand.<no memory space> [shape: f32[1], index: 1, kind: input, shape index: {}]
  %s2 = inlined_call_operand.vmem [shape: f32[2], index: 2, kind: input, shape index: {}]
  %s3 = inlined_call_operand.hbm [shape: f32[4,16,128], index: 3, kind: input, shape index: {}]
  %s4 = inlined_call_operand.hbm [shape: f32[1,2,128], index: 4, kind: output, shape index: {}]
  %s5 = sld [smem:[#allocation0]]
  $region34: #{fwd.1} parent=0
    _
  %s7 = ssub.s32 1, %s5
  %s8 = scalar_select 0, %s7, %s5
  %9 = sst [smem:[#allocation2]] %s0
  %10 = sst [smem:[#allocation3]] %s1
  $region1: #{fwd.1} parent=0
    #allocation4 [shape = 'u8[512]{0}', space=smem, size = 0x200, scoped, tag = 'input window, operand 2, single buffered']
    #allocation5 [shape = 's32[1]{0}', space=sflag, size = 0x4, scoped, tag = 'scoped memory for fwd.1']
    #allocation6 [shape = 's32[1]{0}', space=sflag, size = 0x4, scoped, tag = 'scoped memory for fwd.1']
    #allocation7 [shape = 's32[1]{0}', space=sflag, size = 0x4, scoped, tag = 'scoped memory for fwd.1']
    #allocation8 [shape = 'u8[32768]{0}', space=vmem, size = 0x8000, scoped, tag = 'input window, operand 3, single buffered']
    #allocation9 [shape = 'u8[1024]{0}', space=vmem, size = 0x400, scoped, tag = 'output window, operand 0, single buffered']
    %11 = vsyncpa [#allocation7], 0
    %12 = vsyncpa [#allocation5], 0
    %13 = vsyncpa [#allocation6], 0
    // Predicated region
    $region2: #{fwd.1} parent=1 // pred_check
      _
    $region3: #{fwd.1} parent=1 // pred_check_branch
      %15 = sbr.rel (0) target = $region5
    $region4: #{fwd.1} parent=1 // pred_region
      _
    $region5: #{fwd.1} parent=1 // pred_fallthru
      _
    // Predicated region
    $region6: #{fwd.1} parent=1 // pred_check
      _
    $region7: #{fwd.1} parent=1 // pred_check_branch
      %17 = sbr.rel (0) target = $region9
    $region8: #{fwd.1} parent=1 // pred_region
      _
    $region9: #{fwd.1} parent=1 // pred_fallthru
      _
    // Predicated region
    $region10: #{fwd.1} parent=1 // pred_check
      _
    $region11: #{fwd.1} parent=1 // pred_check_branch
      %19 = sbr.rel (0) target = $region13
    $region12: #{fwd.1} parent=1 // pred_region
      %21 = vsyncadd [#allocation7], 0
      %s23 = sshll.u32 %s2, 4
      %s24 = int_to_ptr.vmem [resolvable:$true] %s23
      %26 = dma.vmem_to_smem %s24, 16, [#allocation4], [#allocation7]
    $region13: #{fwd.1} parent=1 // pred_fallthru
      _
    // Predicated region
    $region14: #{fwd.1} parent=1 // pred_check
      _
    $region15: #{fwd.1} parent=1 // pred_check_branch
      %28 = sbr.rel (0) target = $region17
    $region16: #{fwd.1} parent=1 // pred_region
      %30 = vsyncadd [#allocation5], 0
      %s31 = sshll.u32 %s3, 4
      %s32 = int_to_ptr.hbm [resolvable:$true] %s31
      %s33 = sshll.u32 [#allocation8], 4
      %s34 = int_to_ptr.vmem [resolvable:$true] %s33
      %39 = dma.hbm_to_vmem [thread:$0]  %s32, 1024, %s34, [#allocation5], 128, 128, 8
    $region17: #{fwd.1} parent=1 // pred_fallthru
      _
    // Predicated region
    $region18: #{fwd.1} parent=1 // pred_check
      _
    $region19: #{fwd.1} parent=1 // pred_check_branch
      %41 = sbr.rel (0) target = $region21
    $region20: #{fwd.1} parent=1 // pred_region
      %43 = dma.done [#allocation7], 16
    $region21: #{fwd.1} parent=1 // pred_fallthru
      _
    // Predicated region
    $region22: #{fwd.1} parent=1 // pred_check
      _
    $region23: #{fwd.1} parent=1 // pred_check_branch
      %45 = sbr.rel (0) target = $region25
    $region24: #{fwd.1} parent=1 // pred_region
      %47 = dma.done [#allocation5], 1024
    $region25: #{fwd.1} parent=1 // pred_fallthru
      _
    %48 = sfence
    %s49 = sld [smem:[#allocation2]]
    %s50 = sld [smem:[#allocation3]]
    %s51 = sld [smem:[#allocation4]]
    %s52 = sld [smem:[#allocation4 + $0x1]]
    %v53 = vld [vmem:[#allocation8] sm:$0xff]
    %v54 = vld [vmem:[#allocation8 + $0x8] sm:$0xff]
    %s55 = scalar_lea.vmem [#allocation8], 16
    %v56 = vld [vmem:[%s55] sm:$0xff]
    %v57 = vld [vmem:[%s55 + $0x8] sm:$0xff]
    %s58 = scalar_lea.vmem [#allocation8], 32
    %v59 = vld [vmem:[%s58] sm:$0xff]
    %v60 = vld [vmem:[%s58 + $0x8] sm:$0xff]
    %s61 = scalar_lea.vmem [#allocation8], 48
    %v62 = vld [vmem:[%s61] sm:$0xff]
    %v63 = vld [vmem:[%s61 + $0x8] sm:$0xff]
    %v64 = vstv %s49
    %v65 = vmul.f32 %v64, %v53
    %v66 = vmul.f32 %v64, %v54
    %v67 = vadd.f32 %v65, %v59
    %v68 = vadd.f32 %v66, %v60
    %v69 = vstv %s50
    %v70 = vmul.f32 %v69, %v56
    %v71 = vmul.f32 %v69, %v57
    %v72 = vadd.f32 %v70, %v67
    %v73 = vadd.f32 %v71, %v68
    %vm74 = vcmp.gt.f32.partialorder %v72, 0.0
    %vm75 = vcmp.gt.f32.partialorder %v73, 0.0
    %v76 = vmin.f32 %v72, 0.0
    %v77 = vmin.f32 %v73, 0.0
    %v78 = vmul.f32 %v76, 1.442695
    %v79 = vpow.pop %v78
    %v80 = vmul.f32 %v77, 1.442695
    %v81 = vpow.pop %v80
    %v82 = vsub.f32 %v79, 1.0
    %v83 = vsub.f32 %v81, 1.0
    %v84 = vsel %vm74, %v72, %v82
    %v85 = vsel %vm75, %v73, %v83
    %v86 = vmul.f32 %v84, %v62
    %v87 = vmul.f32 %v85, %v63
    %v88 = vrot.slane %v86, 4
    %v89 = vadd.f32 %v86, %v88
    %v90 = vrot.slane %v89, 2
    %v91 = vadd.f32 %v89, %v90
    %v92 = vrot.slane %v91, 1
    %v93 = vadd.f32 %v91, %v92
    %94 = vadd.xlane.f32.xlu0 %v93
    %v95 = vpop.xlane.xlu0 %94
    %v96 = vstv %s51
    %v97 = vadd.f32 %v95, %v96
    %v98 = vrot.slane %v87, 4
    %v99 = vadd.f32 %v87, %v98
    %v100 = vrot.slane %v99, 2
    %v101 = vadd.f32 %v99, %v100
    %v102 = vrot.slane %v101, 1
    %v103 = vadd.f32 %v101, %v102
    %104 = vadd.xlane.f32.xlu0 %v103
    %v105 = vpop.xlane.xlu0 %104
    %v106 = vstv %s52
    %v107 = vadd.f32 %v105, %v106
    %v108 = vadd.f32 %v69, %v97
    %v109 = vmul.f32 %v108, %v56
    %v110 = vmul.f32 %v108, %v57
    %v111 = vadd.f32 %v109, %v67
    %v112 = vadd.f32 %v110, %v68
    %vm113 = vcmp.gt.f32.partialorder %v111, 0.0
    %vm114 = vcmp.gt.f32.partialorder %v112, 0.0
    %v115 = vmin.f32 %v111, 0.0
    %v116 = vmin.f32 %v112, 0.0
    %v117 = vmul.f32 %v115, 1.442695
    %v118 = vpow.pop %v117
    %v119 = vmul.f32 %v116, 1.442695
    %v120 = vpow.pop %v119
    %v121 = vsub.f32 %v118, 1.0
    %v122 = vsub.f32 %v120, 1.0
    %v123 = vsel %vm113, %v111, %v121
    %v124 = vsel %vm114, %v112, %v122
    %v125 = vmul.f32 %v123, %v62
    %v126 = vmul.f32 %v124, %v63
    %v127 = vrot.slane %v125, 4
    %v128 = vadd.f32 %v125, %v127
    %v129 = vrot.slane %v128, 2
    %v130 = vadd.f32 %v128, %v129
    %v131 = vrot.slane %v130, 1
    %v132 = vadd.f32 %v130, %v131
    %133 = vadd.xlane.f32.xlu0 %v132
    %v134 = vpop.xlane.xlu0 %133
    %v135 = vadd.f32 %v134, %v96
    %v136 = vrot.slane %v126, 4
    %v137 = vadd.f32 %v126, %v136
    %v138 = vrot.slane %v137, 2
    %v139 = vadd.f32 %v137, %v138
    %v140 = vrot.slane %v139, 1
    %v141 = vadd.f32 %v139, %v140
    %142 = vadd.xlane.f32.xlu0 %v141
    %v143 = vpop.xlane.xlu0 %142
    %v144 = vadd.f32 %v143, %v106
    %v145 = vadd.f32 %v108, %v135
    %v146 = vmul.f32 %v145, %v56
    %v147 = vmul.f32 %v145, %v57
    %v148 = vadd.f32 %v146, %v67
    %v149 = vadd.f32 %v147, %v68
    %vm150 = vcmp.gt.f32.partialorder %v148, 0.0
    %vm151 = vcmp.gt.f32.partialorder %v149, 0.0
    %v152 = vmin.f32 %v148, 0.0
    %v153 = vmin.f32 %v149, 0.0
    %v154 = vmul.f32 %v152, 1.442695
    %v155 = vpow.pop %v154
    %v156 = vmul.f32 %v153, 1.442695
    %v157 = vpow.pop %v156
    %v158 = vsub.f32 %v155, 1.0
    %v159 = vsub.f32 %v157, 1.0
    %v160 = vsel %vm150, %v148, %v158
    %v161 = vsel %vm151, %v149, %v159
    %v162 = vmul.f32 %v160, %v62
    %v163 = vmul.f32 %v161, %v63
    %v164 = vrot.slane %v162, 4
    %v165 = vadd.f32 %v162, %v164
    %v166 = vrot.slane %v165, 2
    %v167 = vadd.f32 %v165, %v166
    %v168 = vrot.slane %v167, 1
    %v169 = vadd.f32 %v167, %v168
    %170 = vadd.xlane.f32.xlu0 %v169
    %v171 = vpop.xlane.xlu0 %170
    %v172 = vadd.f32 %v171, %v96
    %v173 = vrot.slane %v163, 4
    %v174 = vadd.f32 %v163, %v173
    %v175 = vrot.slane %v174, 2
    %v176 = vadd.f32 %v174, %v175
    %v177 = vrot.slane %v176, 1
    %v178 = vadd.f32 %v176, %v177
    %179 = vadd.xlane.f32.xlu0 %v178
    %v180 = vpop.xlane.xlu0 %179
    %v181 = vadd.f32 %v180, %v106
    %v182 = vadd.f32 %v145, %v172
    %v183 = vmul.f32 %v182, %v56
    %v184 = vmul.f32 %v182, %v57
    %v185 = vadd.f32 %v183, %v67
    %v186 = vadd.f32 %v184, %v68
    %vm187 = vcmp.gt.f32.partialorder %v185, 0.0
    %vm188 = vcmp.gt.f32.partialorder %v186, 0.0
    %v189 = vmin.f32 %v185, 0.0
    %v190 = vmin.f32 %v186, 0.0
    %v191 = vmul.f32 %v189, 1.442695
    %v192 = vpow.pop %v191
    %v193 = vmul.f32 %v190, 1.442695
    %v194 = vpow.pop %v193
    %v195 = vsub.f32 %v192, 1.0
    %v196 = vsub.f32 %v194, 1.0
    %v197 = vsel %vm187, %v185, %v195
    %v198 = vsel %vm188, %v186, %v196
    %v199 = vmul.f32 %v197, %v62
    %v200 = vmul.f32 %v198, %v63
    %v201 = vrot.slane %v199, 4
    %v202 = vadd.f32 %v199, %v201
    %v203 = vrot.slane %v202, 2
    %v204 = vadd.f32 %v202, %v203
    %v205 = vrot.slane %v204, 1
    %v206 = vadd.f32 %v204, %v205
    %207 = vadd.xlane.f32.xlu0 %v206
    %v208 = vpop.xlane.xlu0 %207
    %v209 = vadd.f32 %v208, %v96
    %v210 = vrot.slane %v200, 4
    %v211 = vadd.f32 %v200, %v210
    %v212 = vrot.slane %v211, 2
    %v213 = vadd.f32 %v211, %v212
    %v214 = vrot.slane %v213, 1
    %v215 = vadd.f32 %v213, %v214
    %216 = vadd.xlane.f32.xlu0 %v215
    %v217 = vpop.xlane.xlu0 %216
    %v218 = vadd.f32 %v217, %v106
    %v219 = vadd.f32 %v182, %v209
    %v220 = vmul.f32 %v219, %v56
    %v221 = vmul.f32 %v219, %v57
    %v222 = vadd.f32 %v220, %v67
    %v223 = vadd.f32 %v221, %v68
    %vm224 = vcmp.gt.f32.partialorder %v222, 0.0
    %vm225 = vcmp.gt.f32.partialorder %v223, 0.0
    %v226 = vmin.f32 %v222, 0.0
    %v227 = vmin.f32 %v223, 0.0
    %v228 = vmul.f32 %v226, 1.442695
    %v229 = vpow.pop %v228
    %v230 = vmul.f32 %v227, 1.442695
    %v231 = vpow.pop %v230
    %v232 = vsub.f32 %v229, 1.0
    %v233 = vsub.f32 %v231, 1.0
    %v234 = vsel %vm224, %v222, %v232
    %v235 = vsel %vm225, %v223, %v233
    %v236 = vmul.f32 %v234, %v62
    %v237 = vmul.f32 %v235, %v63
    %v238 = vrot.slane %v236, 4
    %v239 = vadd.f32 %v236, %v238
    %v240 = vrot.slane %v239, 2
    %v241 = vadd.f32 %v239, %v240
    %v242 = vrot.slane %v241, 1
    %v243 = vadd.f32 %v241, %v242
    %244 = vadd.xlane.f32.xlu0 %v243
    %v245 = vpop.xlane.xlu0 %244
    %v246 = vadd.f32 %v245, %v96
    %v247 = vrot.slane %v237, 4
    %v248 = vadd.f32 %v237, %v247
    %v249 = vrot.slane %v248, 2
    %v250 = vadd.f32 %v248, %v249
    %v251 = vrot.slane %v250, 1
    %v252 = vadd.f32 %v250, %v251
    %253 = vadd.xlane.f32.xlu0 %v252
    %v254 = vpop.xlane.xlu0 %253
    %v255 = vadd.f32 %v254, %v106
    %v256 = vadd.f32 %v219, %v246
    %v257 = vmul.f32 %v256, %v56
    %v258 = vmul.f32 %v256, %v57
    %v259 = vadd.f32 %v257, %v67
    %v260 = vadd.f32 %v258, %v68
    %vm261 = vcmp.gt.f32.partialorder %v259, 0.0
    %vm262 = vcmp.gt.f32.partialorder %v260, 0.0
    %v263 = vmin.f32 %v259, 0.0
    %v264 = vmin.f32 %v260, 0.0
    %v265 = vmul.f32 %v263, 1.442695
    %v266 = vpow.pop %v265
    %v267 = vmul.f32 %v264, 1.442695
    %v268 = vpow.pop %v267
    %v269 = vsub.f32 %v266, 1.0
    %v270 = vsub.f32 %v268, 1.0
    %v271 = vsel %vm261, %v259, %v269
    %v272 = vsel %vm262, %v260, %v270
    %v273 = vmul.f32 %v271, %v62
    %v274 = vmul.f32 %v272, %v63
    %v275 = vrot.slane %v273, 4
    %v276 = vadd.f32 %v273, %v275
    %v277 = vrot.slane %v276, 2
    %v278 = vadd.f32 %v276, %v277
    %v279 = vrot.slane %v278, 1
    %v280 = vadd.f32 %v278, %v279
    %281 = vadd.xlane.f32.xlu0 %v280
    %v282 = vpop.xlane.xlu0 %281
    %v283 = vadd.f32 %v282, %v96
    %v284 = vrot.slane %v274, 4
    %v285 = vadd.f32 %v274, %v284
    %v286 = vrot.slane %v285, 2
    %v287 = vadd.f32 %v285, %v286
    %v288 = vrot.slane %v287, 1
    %v289 = vadd.f32 %v287, %v288
    %290 = vadd.xlane.f32.xlu0 %v289
    %v291 = vpop.xlane.xlu0 %290
    %v292 = vadd.f32 %v291, %v106
    %v293 = vadd.f32 %v256, %v283
    %v294 = vmul.f32 %v293, %v56
    %v295 = vmul.f32 %v293, %v57
    %v296 = vadd.f32 %v294, %v67
    %v297 = vadd.f32 %v295, %v68
    %vm298 = vcmp.gt.f32.partialorder %v296, 0.0
    %vm299 = vcmp.gt.f32.partialorder %v297, 0.0
    %v300 = vmin.f32 %v296, 0.0
    %v301 = vmin.f32 %v297, 0.0
    %v302 = vmul.f32 %v300, 1.442695
    %v303 = vpow.pop %v302
    %v304 = vmul.f32 %v301, 1.442695
    %v305 = vpow.pop %v304
    %v306 = vsub.f32 %v303, 1.0
    %v307 = vsub.f32 %v305, 1.0
    %v308 = vsel %vm298, %v296, %v306
    %v309 = vsel %vm299, %v297, %v307
    %v310 = vmul.f32 %v308, %v62
    %v311 = vmul.f32 %v309, %v63
    %v312 = vrot.slane %v310, 4
    %v313 = vadd.f32 %v310, %v312
    %v314 = vrot.slane %v313, 2
    %v315 = vadd.f32 %v313, %v314
    %v316 = vrot.slane %v315, 1
    %v317 = vadd.f32 %v315, %v316
    %318 = vadd.xlane.f32.xlu0 %v317
    %v319 = vpop.xlane.xlu0 %318
    %v320 = vadd.f32 %v319, %v96
    %v321 = vrot.slane %v311, 4
    %v322 = vadd.f32 %v311, %v321
    %v323 = vrot.slane %v322, 2
    %v324 = vadd.f32 %v322, %v323
    %v325 = vrot.slane %v324, 1
    %v326 = vadd.f32 %v324, %v325
    %327 = vadd.xlane.f32.xlu0 %v326
    %v328 = vpop.xlane.xlu0 %327
    %v329 = vadd.f32 %v328, %v106
    %v330 = vadd.f32 %v293, %v320
    %v331 = vmul.f32 %v330, %v56
    %v332 = vmul.f32 %v330, %v57
    %v333 = vadd.f32 %v331, %v67
    %v334 = vadd.f32 %v332, %v68
    %vm335 = vcmp.gt.f32.partialorder %v333, 0.0
    %vm336 = vcmp.gt.f32.partialorder %v334, 0.0
    %v337 = vmin.f32 %v333, 0.0
    %v338 = vmin.f32 %v334, 0.0
    %v339 = vmul.f32 %v337, 1.442695
    %v340 = vpow.pop %v339
    %v341 = vmul.f32 %v338, 1.442695
    %v342 = vpow.pop %v341
    %v343 = vsub.f32 %v340, 1.0
    %v344 = vsub.f32 %v342, 1.0
    %v345 = vsel %vm335, %v333, %v343
    %v346 = vsel %vm336, %v334, %v344
    %v347 = vmul.f32 %v345, %v62
    %v348 = vmul.f32 %v346, %v63
    %v349 = vrot.slane %v347, 4
    %v350 = vadd.f32 %v347, %v349
    %v351 = vrot.slane %v350, 2
    %v352 = vadd.f32 %v350, %v351
    %v353 = vrot.slane %v352, 1
    %v354 = vadd.f32 %v352, %v353
    %355 = vadd.xlane.f32.xlu0 %v354
    %v356 = vpop.xlane.xlu0 %355
    %v357 = vadd.f32 %v356, %v96
    %v358 = vrot.slane %v348, 4
    %v359 = vadd.f32 %v348, %v358
    %v360 = vrot.slane %v359, 2
    %v361 = vadd.f32 %v359, %v360
    %v362 = vrot.slane %v361, 1
    %v363 = vadd.f32 %v361, %v362
    %364 = vadd.xlane.f32.xlu0 %v363
    %v365 = vpop.xlane.xlu0 %364
    %v366 = vadd.f32 %v365, %v106
    %v367 = vadd.f32 %v330, %v357
    %v368 = vmul.f32 %v367, %v56
    %v369 = vmul.f32 %v367, %v57
    %v370 = vadd.f32 %v368, %v67
    %v371 = vadd.f32 %v369, %v68
    %vm372 = vcmp.gt.f32.partialorder %v370, 0.0
    %vm373 = vcmp.gt.f32.partialorder %v371, 0.0
    %v374 = vmin.f32 %v370, 0.0
    %v375 = vmin.f32 %v371, 0.0
    %v376 = vmul.f32 %v374, 1.442695
    %v377 = vpow.pop %v376
    %v378 = vmul.f32 %v375, 1.442695
    %v379 = vpow.pop %v378
    %v380 = vsub.f32 %v377, 1.0
    %v381 = vsub.f32 %v379, 1.0
    %v382 = vsel %vm372, %v370, %v380
    %v383 = vsel %vm373, %v371, %v381
    %v384 = vmul.f32 %v382, %v62
    %v385 = vmul.f32 %v383, %v63
    %v386 = vrot.slane %v384, 4
    %v387 = vadd.f32 %v384, %v386
    %v388 = vrot.slane %v387, 2
    %v389 = vadd.f32 %v387, %v388
    %v390 = vrot.slane %v389, 1
    %v391 = vadd.f32 %v389, %v390
    %392 = vadd.xlane.f32.xlu0 %v391
    %v393 = vpop.xlane.xlu0 %392
    %v394 = vadd.f32 %v393, %v96
    %v395 = vrot.slane %v385, 4
    %v396 = vadd.f32 %v385, %v395
    %v397 = vrot.slane %v396, 2
    %v398 = vadd.f32 %v396, %v397
    %v399 = vrot.slane %v398, 1
    %v400 = vadd.f32 %v398, %v399
    %401 = vadd.xlane.f32.xlu0 %v400
    %v402 = vpop.xlane.xlu0 %401
    %v403 = vadd.f32 %v402, %v106
    %v404 = vadd.f32 %v367, %v394
    %v405 = vmul.f32 %v404, %v56
    %v406 = vmul.f32 %v404, %v57
    %v407 = vadd.f32 %v405, %v67
    %v408 = vadd.f32 %v406, %v68
    %vm409 = vcmp.gt.f32.partialorder %v407, 0.0
    %vm410 = vcmp.gt.f32.partialorder %v408, 0.0
    %v411 = vmin.f32 %v407, 0.0
    %v412 = vmin.f32 %v408, 0.0
    %v413 = vmul.f32 %v411, 1.442695
    %v414 = vpow.pop %v413
    %v415 = vmul.f32 %v412, 1.442695
    %v416 = vpow.pop %v415
    %v417 = vsub.f32 %v414, 1.0
    %v418 = vsub.f32 %v416, 1.0
    %v419 = vsel %vm409, %v407, %v417
    %v420 = vsel %vm410, %v408, %v418
    %v421 = vmul.f32 %v419, %v62
    %v422 = vmul.f32 %v420, %v63
    %v423 = vrot.slane %v421, 4
    %v424 = vadd.f32 %v421, %v423
    %v425 = vrot.slane %v424, 2
    %v426 = vadd.f32 %v424, %v425
    %v427 = vrot.slane %v426, 1
    %v428 = vadd.f32 %v426, %v427
    %429 = vadd.xlane.f32.xlu0 %v428
    %v430 = vpop.xlane.xlu0 %429
    %v431 = vadd.f32 %v430, %v96
    %v432 = vrot.slane %v422, 4
    %v433 = vadd.f32 %v422, %v432
    %v434 = vrot.slane %v433, 2
    %v435 = vadd.f32 %v433, %v434
    %v436 = vrot.slane %v435, 1
    %v437 = vadd.f32 %v435, %v436
    %438 = vadd.xlane.f32.xlu0 %v437
    %v439 = vpop.xlane.xlu0 %438
    %v440 = vadd.f32 %v439, %v106
    %v441 = vadd.f32 %v404, %v431
    %v442 = vmul.f32 %v441, %v57
    %v443 = vadd.f32 %v442, %v68
    %vm444 = vcmp.gt.f32.partialorder %v443, 0.0
    %v445 = vmin.f32 %v443, 0.0
    %v446 = vmul.f32 %v445, 1.442695
    %v447 = vpow.pop %v446
    %v448 = vsub.f32 %v447, 1.0
    %v449 = vsel %vm444, %v443, %v448
    %v450 = vmul.f32 %v449, %v63
    %v451 = vrot.slane %v450, 4
    %v452 = vadd.f32 %v450, %v451
    %v453 = vrot.slane %v452, 2
    %v454 = vadd.f32 %v452, %v453
    %v455 = vrot.slane %v454, 1
    %v456 = vadd.f32 %v454, %v455
    %457 = vadd.xlane.f32.xlu0 %v456
    %v458 = vpop.xlane.xlu0 %457
    %v459 = vadd.f32 %v458, %v106
    %v460 = vlaneseq
    %v461 = vand.u32 %v460, 127
    %vm462 = vcmp.eq.s32.totalorder %v461, 0
    %v463 = vsel %vm462, %v69, 0.0
    %v464 = vsel %vm462, %v107, 0.0
    %vm465 = vcmp.eq.s32.totalorder %v461, 1
    %v466 = vsel %vm465, %v108, %v463
    %v467 = vsel %vm465, %v144, %v464
    %vm468 = vcmp.eq.s32.totalorder %v461, 2
    %v469 = vsel %vm468, %v145, %v466
    %v470 = vsel %vm468, %v181, %v467
    %vm471 = vcmp.eq.s32.totalorder %v461, 3
    %v472 = vsel %vm471, %v182, %v469
    %v473 = vsel %vm471, %v218, %v470
    %vm474 = vcmp.eq.s32.totalorder %v461, 4
    %v475 = vsel %vm474, %v219, %v472
    %v476 = vsel %vm474, %v255, %v473
    %vm477 = vcmp.eq.s32.totalorder %v461, 5
    %v478 = vsel %vm477, %v256, %v475
    %v479 = vsel %vm477, %v292, %v476
    %vm480 = vcmp.eq.s32.totalorder %v461, 6
    %v481 = vsel %vm480, %v293, %v478
    %v482 = vsel %vm480, %v329, %v479
    %vm483 = vcmp.eq.s32.totalorder %v461, 7
    %v484 = vsel %vm483, %v330, %v481
    %v485 = vsel %vm483, %v366, %v482
    %vm486 = vcmp.eq.s32.totalorder %v461, 8
    %v487 = vsel %vm486, %v367, %v484
    %v488 = vsel %vm486, %v403, %v485
    %vm489 = vcmp.eq.s32.totalorder %v461, 9
    %v490 = vsel %vm489, %v404, %v487
    %v491 = vsel %vm489, %v440, %v488
    %vm492 = vcmp.eq.s32.totalorder %v461, 10
    %v493 = vsel %vm492, %v441, %v490
    %v494 = vsel %vm492, %v459, %v491
    %495 = vst [vmem:[#allocation9] sm:$0x1] %v493
    %496 = vst [vmem:[#allocation9 + $0x1] sm:$0x1] %v494
    // Predicated region
    $region26: #{fwd.1} parent=1 // pred_check
      _
    $region27: #{fwd.1} parent=1 // pred_check_branch
      %498 = sbr.rel (0) target = $region29
    $region28: #{fwd.1} parent=1 // pred_region
      %500 = vsyncadd [#allocation6], 0
      %s502 = sshll.u32 [#allocation9], 4
      %s503 = int_to_ptr.vmem [resolvable:$true] %s502
      %s504 = sshll.u32 %s4, 4
      %s505 = int_to_ptr.hbm [resolvable:$true] %s504
      %507 = dma.vmem_to_hbm [thread:$0]  %s503, 32, %s505, [#allocation6]
    $region29: #{fwd.1} parent=1 // pred_fallthru
      _
    // Predicated region
    $region30: #{fwd.1} parent=1 // pred_check
      _
    $region31: #{fwd.1} parent=1 // pred_check_branch
      %509 = sbr.rel (0) target = $region33
    $region32: #{fwd.1} parent=1 // pred_region
      %511 = dma.done [#allocation6], 32
    $region33: #{fwd.1} parent=1 // pred_fallthru
      _
    %512 = vsyncpa [#allocation5], 1
    %513 = vsyncpa [#allocation6], 1
    %514 = vsyncpa [#allocation7], 1

</llo_original>
